<compile_context>
chip_gen: v7x
topology: tpu7x:2x2x1
jax: 0.10.0
libtpu: 0.0.40
codegen_flags: <defaults>
</compile_context>

<pallas_src>
import functools

import jax
import jax.numpy as jnp
from jax.experimental import pallas as pl
from jax.experimental.pallas import tpu as pltpu


def _round_up(x, m):
    return ((x + m - 1) // m) * m


def _concat_pool_kernel(x_ref, max_ref, mean_ref, *, hw, thw, inv_hw):
    """x_ref: (TM, THW) tile of the (N*C, H*W) slab.

    max_ref / mean_ref: (TM, 1) resident accumulators (same output block across
    the reduction grid axis).
    """
    j = pl.program_id(1)

    @pl.when(j == 0)
    def _():
        max_ref[...] = jnp.full(max_ref.shape, -jnp.inf, dtype=max_ref.dtype)
        mean_ref[...] = jnp.zeros(mean_ref.shape, dtype=mean_ref.dtype)

    x = x_ref[...].astype(jnp.float32)

    # Mask lanes beyond the true H*W extent: the wrapper zero-pads H*W up to
    # the lane tile, which is harmless for the sum but not for the max.
    lane = jax.lax.broadcasted_iota(jnp.int32, x.shape, 1) + j * thw
    x_for_max = jnp.where(lane < hw, x, -jnp.inf)

    max_ref[...] = jnp.maximum(max_ref[...],
                               jnp.max(x_for_max, axis=1, keepdims=True))
    mean_ref[...] += jnp.sum(x, axis=1, keepdims=True)

    @pl.when(j == pl.num_programs(1) - 1)
    def _():
        # Running sum -> mean.  1/HW is a trace-time constant (no divide).
        mean_ref[...] = mean_ref[...] * inv_hw


def adaptive_concat_pool2d(x_nchw, *, max_row_tile=256, max_hw_tile=2048):
    """NCHW input -> (N, 2C, 1, 1) = concat([max_pool, avg_pool], channel)."""
    N, C, H, W = x_nchw.shape
    HW = H * W
    M = N * C

    # Lane-dense layout: rows = N*C, lanes = H*W (reduction axis).
    x2 = x_nchw.reshape(M, HW)

    tm = min(max_row_tile, _round_up(M, 8))      # sublane tile (mult. of 8)
    thw = min(max_hw_tile, _round_up(HW, 128))   # lane tile (mult. of 128)
    mp = _round_up(M, tm)
    hwp = _round_up(HW, thw)
    if (mp, hwp) != (M, HW):
        x2 = jnp.pad(x2, ((0, mp - M), (0, hwp - HW)))

    grid = (mp // tm, hwp // thw)                # reduction axis last
    kern = functools.partial(_concat_pool_kernel, hw=HW, thw=thw,
                             inv_hw=1.0 / float(HW))

    mx, mean = pl.pallas_call(
        kern,
        out_shape=(jax.ShapeDtypeStruct((mp, 1), jnp.float32),
                   jax.ShapeDtypeStruct((mp, 1), jnp.float32)),
        grid_spec=pltpu.PrefetchScalarGridSpec(
            num_scalar_prefetch=0,
            grid=grid,
            in_specs=[pl.BlockSpec((tm, thw), lambda i, j: (i, j))],
            out_specs=[pl.BlockSpec((tm, 1), lambda i, j: (i, 0)),
                       pl.BlockSpec((tm, 1), lambda i, j: (i, 0))]),
        compiler_params=pltpu.CompilerParams(
            dimension_semantics=("parallel", "arbitrary")),
    )(x2)

    mx = mx[:M, 0].reshape(N, C)
    mean = mean[:M, 0].reshape(N, C)
    # torch.cat([self.mp(x), self.ap(x)], 1): max first, then mean.
    out = jnp.concatenate([mx, mean], axis=1)
    return out.reshape(N, 2 * C, 1, 1)


if __name__ == "__main__":
    key = jax.random.PRNGKey(0)
    x = jax.random.normal(key, (2, 4, 16, 16), jnp.float32)

    fwd = jax.jit(adaptive_concat_pool2d)
    y = jax.block_until_ready(fwd(x))

    assert y.shape == (2, 8, 1, 1)
    assert bool(jnp.all(jnp.isfinite(y)))

    # Plain-JAX reference check of the forward semantics.
    xf = x.reshape(2, 4, -1)
    ref = jnp.concatenate([jnp.max(xf, axis=-1), jnp.mean(xf, axis=-1)],
                          axis=1).reshape(2, 8, 1, 1)
    assert bool(jnp.allclose(y, ref, atol=1e-5, rtol=1e-5))

    print("KERNEL_OK")
</pallas_src>

<mosaic_0001>
module attributes {stable_mosaic.version = 11 : i64} {
  func.func @_concat_pool_kernel(%arg0: i32, %arg1: i32, %arg2: memref<8x256xf32, #tpu.memory_space<vmem>>, %arg3: memref<8x1xf32, #tpu.memory_space<vmem>>, %arg4: memref<8x1xf32, #tpu.memory_space<vmem>>) attributes {dimension_semantics = [#tpu.dimension_semantics<parallel>, #tpu.dimension_semantics<arbitrary>], iteration_bounds = array<i64: 1, 1>, scalar_prefetch = 0 : i64, scratch_operands = 0 : i64, tpu.core_type = #tpu.core_type<tc>, window_params = [{transform_indices = @transform_0, window_bounds = array<i64: 8, 256>}, {transform_indices = @transform_1, window_bounds = array<i64: 8, 1>}, {transform_indices = @transform_2, window_bounds = array<i64: 8, 1>}]} {
    %c0_i32 = arith.constant 0 : i32
    %0 = arith.cmpi eq, %arg1, %c0_i32 : i32
    %1 = arith.extui %0 : i1 to i32
    %c0_i32_0 = arith.constant 0 : i32
    %2 = arith.cmpi ne, %1, %c0_i32_0 : i32
    scf.if %2 {
      %cst_15 = arith.constant 0xFF800000 : f32
      %25 = vector.broadcast %cst_15 : f32 to vector<8x1xf32>
      %c0_16 = arith.constant 0 : index
      %c0_17 = arith.constant 0 : index
      %26 = vector.load %arg3[%c0_16, %c0_17] : memref<8x1xf32, #tpu.memory_space<vmem>>, vector<8x1xf32>
      tpu.vector_store %arg3[%c0_16, %c0_17], %25 {strides = array<i32>} : memref<8x1xf32, #tpu.memory_space<vmem>>, vector<8x1xf32>,
      %cst_18 = arith.constant 0.000000e+00 : f32
      %27 = vector.broadcast %cst_18 : f32 to vector<8x1xf32>
      %c0_19 = arith.constant 0 : index
      %c0_20 = arith.constant 0 : index
      %28 = vector.load %arg4[%c0_19, %c0_20] : memref<8x1xf32, #tpu.memory_space<vmem>>, vector<8x1xf32>
      tpu.vector_store %arg4[%c0_19, %c0_20], %27 {strides = array<i32>} : memref<8x1xf32, #tpu.memory_space<vmem>>, vector<8x1xf32>,
    } else {
    }
    %c0 = arith.constant 0 : index
    %c0_1 = arith.constant 0 : index
    %3 = vector.load %arg2[%c0, %c0_1] : memref<8x256xf32, #tpu.memory_space<vmem>>, vector<8x256xf32>
    %4 = tpu.iota {dimensions = array<i32: 1>} : vector<8x256xi32>
    %c256_i32 = arith.constant 256 : i32
    %5 = arith.muli %arg1, %c256_i32 : i32
    %6 = vector.broadcast %5 : i32 to vector<8x256xi32>
    %7 = arith.addi %4, %6 : vector<8x256xi32>
    %c256_i32_2 = arith.constant 256 : i32
    %8 = vector.broadcast %c256_i32_2 : i32 to vector<8x256xi32>
    %9 = arith.cmpi slt, %7, %8 : vector<8x256xi32>
    %cst = arith.constant 0xFF800000 : f32
    %10 = vector.broadcast %cst : f32 to vector<8x256xf32>
    %11 = arith.select %9, %3, %10 : vector<8x256xi1>, vector<8x256xf32>
    %c0_3 = arith.constant 0 : index
    %c0_4 = arith.constant 0 : index
    %12 = vector.load %arg3[%c0_3, %c0_4] : memref<8x1xf32, #tpu.memory_space<vmem>>, vector<8x1xf32>
    %cst_5 = arith.constant dense<0xFF800000> : vector<8xf32>
    %13 = vector.multi_reduction <maximumf>, %11, %cst_5 [1] : vector<8x256xf32> to vector<8xf32>
    %14 = vector.shape_cast %13 : vector<8xf32> to vector<8x1xf32>
    %15 = arith.maximumf %12, %14 : vector<8x1xf32>
    %c0_6 = arith.constant 0 : index
    %c0_7 = arith.constant 0 : index
    %16 = vector.load %arg3[%c0_6, %c0_7] : memref<8x1xf32, #tpu.memory_space<vmem>>, vector<8x1xf32>
    tpu.vector_store %arg3[%c0_6, %c0_7], %15 {strides = array<i32>} : memref<8x1xf32, #tpu.memory_space<vmem>>, vector<8x1xf32>,
    %c0_8 = arith.constant 0 : index
    %c0_9 = arith.constant 0 : index
    %17 = vector.load %arg4[%c0_8, %c0_9] : memref<8x1xf32, #tpu.memory_space<vmem>>, vector<8x1xf32>
    %cst_10 = arith.constant dense<0.000000e+00> : vector<8xf32>
    %18 = vector.multi_reduction <add>, %3, %cst_10 [1] : vector<8x256xf32> to vector<8xf32>
    %19 = vector.shape_cast %18 : vector<8xf32> to vector<8x1xf32>
    %20 = arith.addf %17, %19 : vector<8x1xf32>
    %c0_11 = arith.constant 0 : index
    %c0_12 = arith.constant 0 : index
    %21 = vector.load %arg4[%c0_11, %c0_12] : memref<8x1xf32, #tpu.memory_space<vmem>>, vector<8x1xf32>
    tpu.vector_store %arg4[%c0_11, %c0_12], %20 {strides = array<i32>} : memref<8x1xf32, #tpu.memory_space<vmem>>, vector<8x1xf32>,
    %c0_i32_13 = arith.constant 0 : i32
    %22 = arith.cmpi eq, %arg1, %c0_i32_13 : i32
    %23 = arith.extui %22 : i1 to i32
    %c0_i32_14 = arith.constant 0 : i32
    %24 = arith.cmpi ne, %23, %c0_i32_14 : i32
    scf.if %24 {
      %c0_15 = arith.constant 0 : index
      %c0_16 = arith.constant 0 : index
      %25 = vector.load %arg4[%c0_15, %c0_16] : memref<8x1xf32, #tpu.memory_space<vmem>>, vector<8x1xf32>
      %cst_17 = arith.constant 3.906250e-03 : f32
      %26 = vector.broadcast %cst_17 : f32 to vector<8x1xf32>
      %27 = arith.mulf %25, %26 : vector<8x1xf32>
      %c0_18 = arith.constant 0 : index
      %c0_19 = arith.constant 0 : index
      %28 = vector.load %arg4[%c0_18, %c0_19] : memref<8x1xf32, #tpu.memory_space<vmem>>, vector<8x1xf32>
      tpu.vector_store %arg4[%c0_18, %c0_19], %27 {strides = array<i32>} : memref<8x1xf32, #tpu.memory_space<vmem>>, vector<8x1xf32>,
    } else {
    }
    return
  }
  func.func @transform_0(%arg0: i32, %arg1: i32) -> (i32, i32) {
    %c0_i32 = arith.constant 0 : i32
    return %arg0, %arg1 : i32, i32
  }
  func.func @transform_1(%arg0: i32, %arg1: i32) -> (i32, i32) {
    %c0_i32 = arith.constant 0 : i32
    %c0_i32_0 = arith.constant 0 : i32
    return %arg0, %c0_i32 : i32, i32
  }
  func.func @transform_2(%arg0: i32, %arg1: i32) -> (i32, i32) {
    %c0_i32 = arith.constant 0 : i32
    %c0_i32_0 = arith.constant 0 : i32
    return %arg0, %c0_i32 : i32, i32
  }
}

</mosaic_0001>

<llo_original>
// kernel: squeeze.3
$region0: #{squeeze.3}
  %s0 = inlined_call_operand.vmem [shape: f32[8], index: 0, kind: input, shape index: {}]
  %s1 = inlined_call_operand.vmem [shape: f32[2,4], index: 1, kind: output, shape index: {}]
  $region1: #{squeeze.3} parent=0
    #allocation0 [shape = 'u8[4096]{0}', space=vmem, size = 0x1000, scoped, tag = 'scoped mem for output reshape']
    #allocation1 [shape = 'u8[4096]{0}', space=vmem, size = 0x1000, scoped, tag = 'scoped mem for input reshape']
    %s3 = sshllo.u32 0, 1
    %v4 = vld [vmem:[%s0] sm:%s3]
    %5 = vst [vmem:[#allocation1] sm:%s3] %v4
    %v6 = vld [vmem:[#allocation1] sm:$0x1]
    %vm7 = vcmask 31744
    %8 = vst.msk [vmem:[#allocation0] sm:$0x1] %vm7, %v6
    %v9 = vld [vmem:[#allocation1] sm:$0x1]
    %10 = vrot.lane.b32.xlu0 %v9, 124
    %v11 = vpop.permute.xlu0 %10
    %vm12 = vcmask 31744
    %s13 = scalar_lea.vmem [#allocation0], 1
    %14 = vst.msk [vmem:[%s13] sm:$0x1] %vm12, %v11
    %s16 = sshllo.u32 0, 2
    %v18 = vld [vmem:[#allocation0] sm:%s16]
    %s19 = sshllo.u32 0, 2
    %20 = vst [vmem:[%s1] sm:%s19] %v18

// kernel: adaptive_concat_pool2d.1
$region0: #{adaptive_concat_pool2d.1}
  #allocation0 [shape = 'u32[]', space=smem, size = 0x4, offset = 0x4, fixed_abs, tag = 'smem constant byte address 0x4 - core index']
  #allocation1 [shape = 'u32[144,128]{1,0:T(1,128)}', space=vmem, size = 0x12000, scoped, tag = 'internal scratch']
  %s0 = inlined_call_operand.vmem [shape: f32[8,256], index: 0, kind: input, shape index: {}]
  %s1 = inlined_call_operand.vmem [shape: f32[8,1], index: 1, kind: output, shape index: {0}]
  %s2 = inlined_call_operand.vmem [shape: f32[8,1], index: 2, kind: output, shape index: {1}]
  %3 = xla_tuple %s1, %s2
  %s4 = sld [smem:[#allocation0]]
  $region30: #{adaptive_concat_pool2d.1} parent=0
    _
  %s6 = ssub.s32 1, %s4
  %s7 = scalar_select 0, %s6, %s4
  // Predicated region
  $region2: #{adaptive_concat_pool2d.1} parent=0 // pred_check
    _
  $region3: #{adaptive_concat_pool2d.1} parent=0 // pred_check_branch
    %9 = sbr.rel (0) target = $region5
  $region4: #{adaptive_concat_pool2d.1} parent=0 // pred_region
    _
  $region5: #{adaptive_concat_pool2d.1} parent=0 // pred_fallthru
    _
  %p10 = scmp.eq.s32.totalorder 0, 0
  // Predicated region
  $region6: #{adaptive_concat_pool2d.1} parent=0 // pred_check
    %p11 = pneg %p10
  $region7: #{adaptive_concat_pool2d.1} parent=0 // pred_check_branch
    %13 = sbr.rel (%p11) target = $region9
  $region8: #{adaptive_concat_pool2d.1} parent=0 // pred_region
    %vm14 = vcmask 7168
    %15 = vst.msk [vmem:[%s1] sm:$0xff] %vm14, -inf
    %16 = vst.msk [vmem:[%s2] sm:$0xff] %vm14, 0.0
  $region9: #{adaptive_concat_pool2d.1} parent=0 // pred_fallthru
    _
  %v17 = vld [vmem:[%s0] sm:$0xff]
  %v18 = vld [vmem:[%s0 + $0x8] sm:$0xff]
  %v19 = vlaneseq
  %v20 = vand.u32 %v19, 127
  %v21 = vadd.s32 %v20, 128
  %s22 = smul.u32 0, 256
  %v23 = vstv %s22
  %v24 = vadd.s32 %v20, %v23
  %v25 = vadd.s32 %v21, %v23
  %vm26 = vcmp.lt.s32.totalorder %v24, 256
  %vm27 = vcmp.lt.s32.totalorder %v25, 256
  %v28 = vsel %vm26, %v17, -inf
  %v29 = vsel %vm27, %v18, -inf
  %v30 = vld [vmem:[%s1] sm:$0xff]
  %v31 = vmax.f32 %v28, %v29
  %32 = vmax.xlane.f32.xlu0 %v31
  %v33 = vpop.xlane.xlu0 %32
  %v34 = vmax.f32 %v30, %v33
  %vm35 = vcmask 7168
  %36 = vst.msk [vmem:[%s1] sm:$0xff] %vm35, %v34
  %v37 = vld [vmem:[%s2] sm:$0xff]
  %v38 = vadd.f32 %v17, %v18
  %39 = vadd.xlane.f32.xlu0 %v38
  %v40 = vpop.xlane.xlu0 %39
  %v41 = vadd.f32 %v37, %v40
  %42 = vst.msk [vmem:[%s2] sm:$0xff] %vm35, %v41
  // Predicated region
  $region10: #{adaptive_concat_pool2d.1} parent=0 // pred_check
    %p43 = pneg %p10
  $region11: #{adaptive_concat_pool2d.1} parent=0 // pred_check_branch
    %45 = sbr.rel (%p43) target = $region13
  $region12: #{adaptive_concat_pool2d.1} parent=0 // pred_region
    %v46 = vld [vmem:[%s2] sm:$0xff]
    %v47 = vmul.f32 %v46, 0.00390625
    %48 = vst.msk [vmem:[%s2] sm:$0xff] %vm35, %v47
  $region13: #{adaptive_concat_pool2d.1} parent=0 // pred_fallthru
    _
  // Predicated region
  $region14: #{adaptive_concat_pool2d.1} parent=0 // pred_check
    _
  $region15: #{adaptive_concat_pool2d.1} parent=0 // pred_check_branch
    %50 = sbr.rel (0) target = $region17
  $region16: #{adaptive_concat_pool2d.1} parent=0 // pred_region
    _
  $region17: #{adaptive_concat_pool2d.1} parent=0 // pred_fallthru
    _
  // Predicated region
  $region18: #{adaptive_concat_pool2d.1} parent=0 // pred_check
    _
  $region19: #{adaptive_concat_pool2d.1} parent=0 // pred_check_branch
    %52 = sbr.rel (0) target = $region21
  $region20: #{adaptive_concat_pool2d.1} parent=0 // pred_region
    _
  $region21: #{adaptive_concat_pool2d.1} parent=0 // pred_fallthru
    _
  // Predicated region
  $region22: #{adaptive_concat_pool2d.1} parent=0 // pred_check
    _
  $region23: #{adaptive_concat_pool2d.1} parent=0 // pred_check_branch
    %54 = sbr.rel (0) target = $region25
  $region24: #{adaptive_concat_pool2d.1} parent=0 // pred_region
    _
  $region25: #{adaptive_concat_pool2d.1} parent=0 // pred_fallthru
    _
  // Predicated region
  $region26: #{adaptive_concat_pool2d.1} parent=0 // pred_check
    _
  $region27: #{adaptive_concat_pool2d.1} parent=0 // pred_check_branch
    %56 = sbr.rel (0) target = $region29
  $region28: #{adaptive_concat_pool2d.1} parent=0 // pred_region
    _
  $region29: #{adaptive_concat_pool2d.1} parent=0 // pred_fallthru
    _

</llo_original>
